<compile_context>
chip_gen: v6e
topology: v6e:2x2x1
jax: 0.10.0
libtpu: 0.0.40
codegen_flags: <defaults>
</compile_context>

<pallas_src>
import functools
import math

import jax
import jax.numpy as jnp
from jax.experimental import pallas as pl
from jax.experimental.pallas import tpu as pltpu


def _round_up(x, m):
    return (x + m - 1) // m * m


# ----------------------------------------------------------------------------
# Pallas kernel: fused Linear (MXU) + row-wise softmax, narrow output.
# ----------------------------------------------------------------------------
def _linear_softmax_kernel(x_ref, w_ref, b_ref, o_ref):
    # x_ref: (TN, F)  tile of flattened feature rows. The ragged last tile may
    #                 contain garbage rows past n_rows; rows are independent
    #                 and OOB output rows are dropped, so any Inf/NaN they
    #                 produce never reaches HBM.
    # w_ref: (F, C)   Linear weight transposed (grid-invariant -> resident).
    # b_ref: (1, C)   bias, f32.
    # o_ref: (TN, C)  softmax probabilities (C == classes, no padding/slice).
    logits = jnp.dot(x_ref[...], w_ref[...], preferred_element_type=jnp.float32)
    logits = logits + b_ref[...]

    m = jnp.max(logits, axis=-1, keepdims=True)
    e = jnp.exp(logits - m)
    o_ref[...] = (e / jnp.sum(e, axis=-1, keepdims=True)).astype(o_ref.dtype)


# ----------------------------------------------------------------------------
# Parameter preparation (run ONCE per parameter set — hoisted out of the
# per-call hot path per the perf review).
# ----------------------------------------------------------------------------
def prepare_head_params(weight, bias, bn=None, *, input_dtype=jnp.float32):
    """Precompute (W^T, bias[1,C]) for sbp_head_forward.

    weight: (C, F)  nn.Linear weight (PyTorch layout).
    bias:   (C,)    nn.Linear bias.
    bn:     optional dict {gamma, beta, mean, var[, eps]} — inference-mode
            BatchNorm1d(F) folded exactly into the Linear. Default None matches
            the reference forward (which never applies its self.bn).
    input_dtype: dtype of the streamed x / W^T (f32 default; bf16 fast path).
    """
    classes, feature = weight.shape
    w_t = weight.astype(jnp.float32).T            # (F, C)
    b = bias.astype(jnp.float32)                  # (C,)

    if bn is not None:
        # (x*scale + shift) @ W^T + b == x @ (scale[:,None]*W^T) + (shift@W^T + b)
        eps = bn.get("eps", 1e-5)
        scale = bn["gamma"].astype(jnp.float32) / jnp.sqrt(
            bn["var"].astype(jnp.float32) + eps)
        shift = bn["beta"].astype(jnp.float32) - bn["mean"].astype(jnp.float32) * scale
        b = b + shift @ w_t                       # unscaled w_t here
        w_t = w_t * scale[:, None]

    w_t = w_t.astype(input_dtype)                 # bias stays f32 (sentinel-free)
    return w_t, b.reshape(1, classes)


# ----------------------------------------------------------------------------
# Forward (hot path)
# ----------------------------------------------------------------------------
@functools.partial(jax.jit,
                   static_argnames=("row_tile", "input_dtype", "out_dtype"))
def sbp_head_forward(x, w_t, b2d, *, row_tile=4096, input_dtype=jnp.float32,
                     out_dtype=jnp.float32):
    """SBP_1Dconv_Head_NN forward: view(-1, F) -> Linear(F, C) -> Softmax(dim=1).

    x:    (..., F) encoder features (e.g. (b, c, dense)); flattened to (-1, F).
    w_t:  (F, C)   from prepare_head_params.
    b2d:  (1, C)   from prepare_head_params.
    row_tile: max rows per grid step (multiple of 8); 2048-8192 amortizes the
            ~0.35us/step overhead on all generations.
    out_dtype: f32 (default) or bf16 to further halve output writes (opt-in,
            breaks 1e-5 agreement).
    """
    if row_tile % 8 != 0:
        raise ValueError("row_tile must be a multiple of 8")

    feature, classes = w_t.shape
    x2d = jnp.reshape(x, (-1, feature)).astype(input_dtype)
    n_rows = x2d.shape[0]

    # Row tiling: keep >= 2 balanced grid steps whenever there is enough work
    # (n_rows >= 16) so both v7x TensorCores are used; cap at row_tile.
    if n_rows >= 16:
        tile = min(row_tile, _round_up(pl.cdiv(n_rows, 2), 8))
    else:
        tile = n_rows                             # single block == full array dim
    grid = (pl.cdiv(n_rows, tile),)

    return pl.pallas_call(
        _linear_softmax_kernel,
        out_shape=jax.ShapeDtypeStruct((n_rows, classes), out_dtype),
        grid_spec=pltpu.PrefetchScalarGridSpec(
            num_scalar_prefetch=0,
            grid=grid,
            in_specs=[
                pl.BlockSpec((tile, feature), lambda i: (i, 0)),    # x rows
                pl.BlockSpec((feature, classes), lambda i: (0, 0)),  # W^T (resident)
                pl.BlockSpec((1, classes), lambda i: (0, 0)),        # bias (resident)
            ],
            out_specs=pl.BlockSpec((tile, classes), lambda i: (i, 0)),
        ),
        compiler_params=pltpu.CompilerParams(
            dimension_semantics=("parallel",),
        ),
    )(x2d, w_t, b2d)


def sbp_1dconv_head_forward(x, weight, bias, bn=None, *, row_tile=4096,
                            input_dtype=jnp.float32, out_dtype=jnp.float32):
    """Convenience one-shot wrapper (prefer prepare_head_params + sbp_head_forward
    when parameters are reused across calls)."""
    w_t, b2d = prepare_head_params(weight, bias, bn, input_dtype=input_dtype)
    return sbp_head_forward(x, w_t, b2d, row_tile=row_tile,
                            input_dtype=input_dtype, out_dtype=out_dtype)


if __name__ == "__main__":
    key = jax.random.PRNGKey(0)
    k_x, k_w, k_b, k_g, k_bt, k_m, k_v, k_x2 = jax.random.split(key, 8)

    # StoppedBandPathway_1Dconv defaults: bands=[0,1,2,3,4] -> classes=5, dense=128.
    classes, feature = 5, 128
    batch, chans = 2, 4                      # encoder output shape (b, c, dense)
    x = jax.random.normal(k_x, (batch, chans, feature), dtype=jnp.float32)

    # nn.Linear(feature, classes): xavier_uniform_ weight, default uniform bias.
    bound_w = math.sqrt(6.0 / (feature + classes))
    w = jax.random.uniform(k_w, (classes, feature), jnp.float32, -bound_w, bound_w)
    bound_b = 1.0 / math.sqrt(feature)
    bias = jax.random.uniform(k_b, (classes,), jnp.float32, -bound_b, bound_b)

    # --- 1) spec-faithful head: Linear + Softmax (f32, bit-faithful) ---------
    w_t, b2d = prepare_head_params(w, bias)
    out = jax.block_until_ready(sbp_head_forward(x, w_t, b2d))

    x2d = x.reshape(-1, feature)
    ref = jax.nn.softmax(x2d @ w.T + bias, axis=1)
    assert out.shape == (batch * chans, classes)
    assert jnp.allclose(out, ref, atol=1e-5, rtol=1e-5), "mismatch vs reference"
    assert jnp.allclose(jnp.sum(out, axis=1), 1.0, atol=1e-5), "rows must sum to 1"

    # --- 2) multi-step grid + ragged last block (rows not a tile multiple) ---
    xb = jax.random.normal(k_x2, (25, 12, feature), dtype=jnp.float32)  # 300 rows
    out_big = jax.block_until_ready(sbp_head_forward(xb, w_t, b2d))
    ref_big = jax.nn.softmax(xb.reshape(-1, feature) @ w.T + bias, axis=1)
    assert out_big.shape == (300, classes)
    assert jnp.allclose(out_big, ref_big, atol=1e-5, rtol=1e-5), "ragged mismatch"

    # --- 3) optional BN-folded path (BN folded into W/b at prep time) --------
    bn = {
        "gamma": jax.random.uniform(k_g, (feature,), jnp.float32, 0.5, 1.5),
        "beta": 0.1 * jax.random.normal(k_bt, (feature,), jnp.float32),
        "mean": 0.2 * jax.random.normal(k_m, (feature,), jnp.float32),
        "var": jax.random.uniform(k_v, (feature,), jnp.float32, 0.5, 2.0),
    }
    out_bn = jax.block_until_ready(sbp_1dconv_head_forward(x, w, bias, bn=bn))
    xn = (x2d - bn["mean"]) / jnp.sqrt(bn["var"] + 1e-5) * bn["gamma"] + bn["beta"]
    ref_bn = jax.nn.softmax(xn @ w.T + bias, axis=1)
    assert jnp.allclose(out_bn, ref_bn, atol=1e-5, rtol=1e-5), "BN-fold mismatch"

    # --- 4) recommended bf16 fast path (halves x HBM traffic; ~1e-3 rel err) -
    w_t16, b2d16 = prepare_head_params(w, bias, input_dtype=jnp.bfloat16)
    out16 = jax.block_until_ready(
        sbp_head_forward(xb, w_t16, b2d16, input_dtype=jnp.bfloat16))
    assert jnp.allclose(out16, ref_big, atol=2e-2, rtol=2e-2), "bf16 path mismatch"

    print("KERNEL_OK")
</pallas_src>

<mosaic_0001>
module attributes {stable_mosaic.version = 11 : i64} {
  func.func @_linear_softmax_kernel(%arg0: i32, %arg1: memref<8x128xf32, #tpu.memory_space<vmem>>, %arg2: memref<128x5xf32, #tpu.memory_space<vmem>>, %arg3: memref<1x5xf32, #tpu.memory_space<vmem>>, %arg4: memref<8x5xf32, #tpu.memory_space<vmem>>) attributes {dimension_semantics = [#tpu.dimension_semantics<parallel>], iteration_bounds = array<i64: 1>, scalar_prefetch = 0 : i64, scratch_operands = 0 : i64, tpu.core_type = #tpu.core_type<tc>, window_params = [{transform_indices = @transform_0, window_bounds = array<i64: 8, 128>}, {pipeline_mode = #tpu.pipeline_mode<synchronous>, transform_indices = @transform_1, window_bounds = array<i64: 128, 5>}, {pipeline_mode = #tpu.pipeline_mode<synchronous>, transform_indices = @transform_2, window_bounds = array<i64: 1, 5>}, {transform_indices = @transform_3, window_bounds = array<i64: 8, 5>}]} {
    %c0 = arith.constant 0 : index
    %c0_0 = arith.constant 0 : index
    %0 = vector.load %arg1[%c0, %c0_0] : memref<8x128xf32, #tpu.memory_space<vmem>>, vector<8x128xf32>
    %c0_1 = arith.constant 0 : index
    %c0_2 = arith.constant 0 : index
    %1 = vector.load %arg2[%c0_1, %c0_2] : memref<128x5xf32, #tpu.memory_space<vmem>>, vector<128x5xf32>
    %cst = arith.constant dense<0.000000e+00> : vector<8x5xf32>
    %2 = tpu.matmul %0, %1, %cst {dimension_numbers = #tpu.dot_dimension_numbers<[1], [0], [0], [1], [0, 0, 1, 1], [], []>} : vector<8x128xf32>, vector<128x5xf32>, vector<8x5xf32> -> vector<8x5xf32>
    %c0_3 = arith.constant 0 : index
    %c0_4 = arith.constant 0 : index
    %3 = vector.load %arg3[%c0_3, %c0_4] : memref<1x5xf32, #tpu.memory_space<vmem>>, vector<1x5xf32>
    %4 = vector.broadcast %3 : vector<1x5xf32> to vector<8x5xf32>
    %5 = arith.addf %2, %4 : vector<8x5xf32>
    %cst_5 = arith.constant dense<0xFF800000> : vector<8xf32>
    %6 = vector.multi_reduction <maximumf>, %5, %cst_5 [1] : vector<8x5xf32> to vector<8xf32>
    %7 = vector.shape_cast %6 : vector<8xf32> to vector<8x1xf32>
    %8 = vector.broadcast %7 : vector<8x1xf32> to vector<8x5xf32>
    %9 = arith.subf %5, %8 : vector<8x5xf32>
    %10 = math.exp %9 : vector<8x5xf32>
    %cst_6 = arith.constant dense<0.000000e+00> : vector<8xf32>
    %11 = vector.multi_reduction <add>, %10, %cst_6 [1] : vector<8x5xf32> to vector<8xf32>
    %12 = vector.shape_cast %11 : vector<8xf32> to vector<8x1xf32>
    %13 = vector.broadcast %12 : vector<8x1xf32> to vector<8x5xf32>
    %14 = arith.divf %10, %13 : vector<8x5xf32>
    %c0_7 = arith.constant 0 : index
    %c0_8 = arith.constant 0 : index
    %15 = vector.load %arg4[%c0_7, %c0_8] : memref<8x5xf32, #tpu.memory_space<vmem>>, vector<8x5xf32>
    tpu.vector_store %arg4[%c0_7, %c0_8], %14 {strides = array<i32>} : memref<8x5xf32, #tpu.memory_space<vmem>>, vector<8x5xf32>,
    return
  }
  func.func @transform_0(%arg0: i32) -> (i32, i32) {
    %c0_i32 = arith.constant 0 : i32
    %c0_i32_0 = arith.constant 0 : i32
    return %arg0, %c0_i32 : i32, i32
  }
  func.func @transform_1(%arg0: i32) -> (i32, i32) {
    %c0_i32 = arith.constant 0 : i32
    %c0_i32_0 = arith.constant 0 : i32
    %c0_i32_1 = arith.constant 0 : i32
    return %c0_i32, %c0_i32_0 : i32, i32
  }
  func.func @transform_2(%arg0: i32) -> (i32, i32) {
    %c0_i32 = arith.constant 0 : i32
    %c0_i32_0 = arith.constant 0 : i32
    %c0_i32_1 = arith.constant 0 : i32
    return %c0_i32, %c0_i32_0 : i32, i32
  }
  func.func @transform_3(%arg0: i32) -> (i32, i32) {
    %c0_i32 = arith.constant 0 : i32
    %c0_i32_0 = arith.constant 0 : i32
    return %arg0, %c0_i32 : i32, i32
  }
}

</mosaic_0001>

<llo_original>
// kernel: sbp_head_forward.1
$region0: #{sbp_head_forward.1}
  #allocation0 [shape = 'u32[]', space=smem, size = 0x4, offset = 0x4, fixed_abs, tag = 'smem constant byte address 0x4 - core index']
  #allocation1 [shape = 'u32[144,128]{1,0:T(1,128)}', space=vmem, size = 0x12000, scoped, tag = 'internal scratch']
  %s0 = inlined_call_operand.vmem [shape: f32[8,128], index: 0, kind: input, shape index: {}]
  %s1 = inlined_call_operand.vmem [shape: f32[128,5], index: 1, kind: input, shape index: {}]
  %s2 = inlined_call_operand.vmem [shape: f32[1,5], index: 2, kind: input, shape index: {}]
  %s3 = inlined_call_operand.hbm [shape: f32[8,5], index: 3, kind: output, shape index: {}]
  %s4 = sld [smem:[#allocation0]]
  $region22: #{sbp_head_forward.1} parent=0
    _
  %s6 = ssub.s32 1, %s4
  %s7 = scalar_select 0, %s6, %s4
  $region1: #{sbp_head_forward.1} parent=0
    #allocation2 [shape = 'u8[4096]{0}', space=vmem, size = 0x1000, scoped, tag = 'output window, operand 0, single buffered']
    #allocation3 [shape = 's32[1]{0}', space=sflag, size = 0x4, scoped, tag = 'scoped memory for sbp_head_forward.1']
    %8 = vsyncpa [#allocation3], 0
    // Predicated region
    $region2: #{sbp_head_forward.1} parent=1 // pred_check
      _
    $region3: #{sbp_head_forward.1} parent=1 // pred_check_branch
      %10 = sbr.rel (0) target = $region5
    $region4: #{sbp_head_forward.1} parent=1 // pred_region
      _
    $region5: #{sbp_head_forward.1} parent=1 // pred_fallthru
      _
    // Predicated region
    $region6: #{sbp_head_forward.1} parent=1 // pred_check
      _
    $region7: #{sbp_head_forward.1} parent=1 // pred_check_branch
      %12 = sbr.rel (0) target = $region9
    $region8: #{sbp_head_forward.1} parent=1 // pred_region
      _
    $region9: #{sbp_head_forward.1} parent=1 // pred_fallthru
      _
    // Predicated region
    $region10: #{sbp_head_forward.1} parent=1 // pred_check
      _
    $region11: #{sbp_head_forward.1} parent=1 // pred_check_branch
      %14 = sbr.rel (0) target = $region13
    $region12: #{sbp_head_forward.1} parent=1 // pred_region
      _
    $region13: #{sbp_head_forward.1} parent=1 // pred_fallthru
      _
    %v15 = vld [vmem:[%s0] sm:$0xff]
    %v16 = vld [vmem:[%s1] sm:$0xff]
    %v17 = vld [vmem:[%s1 + $0x8] sm:$0xff]
    %v18 = vld [vmem:[%s1 + $0x10] sm:$0xff]
    %v19 = vld [vmem:[%s1 + $0x18] sm:$0xff]
    %v20 = vld [vmem:[%s1 + $0x20] sm:$0xff]
    %v21 = vld [vmem:[%s1 + $0x28] sm:$0xff]
    %v22 = vld [vmem:[%s1 + $0x30] sm:$0xff]
    %v23 = vld [vmem:[%s1 + $0x38] sm:$0xff]
    %v24 = vld [vmem:[%s1 + $0x40] sm:$0xff]
    %v25 = vld [vmem:[%s1 + $0x48] sm:$0xff]
    %v26 = vld [vmem:[%s1 + $0x50] sm:$0xff]
    %v27 = vld [vmem:[%s1 + $0x58] sm:$0xff]
    %v28 = vld [vmem:[%s1 + $0x60] sm:$0xff]
    %v29 = vld [vmem:[%s1 + $0x68] sm:$0xff]
    %v30 = vld [vmem:[%s1 + $0x70] sm:$0xff]
    %v31 = vld [vmem:[%s1 + $0x78] sm:$0xff]
    %v32 = vld [vmem:[%s2] sm:$0x1]
    %v34 = vlaneseq
    %v35 = vshrl.u32 %v34, 7
    %v36 = vsub.s32 0, %v35
    %v37 = vrot.slane %v32, %v36
    %39 = vmatprep.subr.mxu0 0.0
    %40 = vmatpush1.msra.mxu0 %v31
    %41 = vmatprep.subr.mxu0 0.0
    %42 = vmatpush1.msra.mxu0 %v30
    %43 = vmatprep.subr.mxu0 0.0
    %44 = vmatpush1.msra.mxu0 %v29
    %45 = vmatprep.subr.mxu0 0.0
    %46 = vmatpush1.msra.mxu0 %v28
    %47 = vmatprep.subr.mxu0 0.0
    %48 = vmatpush1.msra.mxu0 %v27
    %49 = vmatprep.subr.mxu0 0.0
    %50 = vmatpush1.msra.mxu0 %v26
    %51 = vmatprep.subr.mxu0 0.0
    %52 = vmatpush1.msra.mxu0 %v25
    %53 = vmatprep.subr.mxu0 0.0
    %54 = vmatpush1.msra.mxu0 %v24
    %55 = vmatprep.subr.mxu0 0.0
    %56 = vmatpush1.msra.mxu0 %v23
    %57 = vmatprep.subr.mxu0 0.0
    %58 = vmatpush1.msra.mxu0 %v22
    %59 = vmatprep.subr.mxu0 0.0
    %60 = vmatpush1.msra.mxu0 %v21
    %61 = vmatprep.subr.mxu0 0.0
    %62 = vmatpush1.msra.mxu0 %v20
    %63 = vmatprep.subr.mxu0 0.0
    %64 = vmatpush1.msra.mxu0 %v19
    %65 = vmatprep.subr.mxu0 0.0
    %66 = vmatpush1.msra.mxu0 %v18
    %67 = vmatprep.subr.mxu0 0.0
    %68 = vmatpush1.msra.mxu0 %v17
    %69 = vmatprep.subr.mxu0 0.0
    %70 = vmatpush1.msra.mxu0 %v16
    %71 = vmatprep.subr.mxu0 0.0
    %72 = vmatpush2.msra.mxu0 0.0
    %73 = vmatprep.subr.mxu0 0.0
    %74 = vmatpush2.msra.mxu0 0.0
    %75 = vmatprep.subr.mxu0 0.0
    %76 = vmatpush2.msra.mxu0 0.0
    %77 = vmatprep.subr.mxu0 0.0
    %78 = vmatpush2.msra.mxu0 0.0
    %79 = vmatprep.subr.mxu0 0.0
    %80 = vmatpush2.msra.mxu0 0.0
    %81 = vmatprep.subr.mxu0 0.0
    %82 = vmatpush2.msra.mxu0 0.0
    %83 = vmatprep.subr.mxu0 0.0
    %84 = vmatpush2.msra.mxu0 0.0
    %85 = vmatprep.subr.mxu0 0.0
    %86 = vmatpush2.msra.mxu0 0.0
    %87 = vmatprep.subr.mxu0 0.0
    %88 = vmatpush2.msra.mxu0 0.0
    %89 = vmatprep.subr.mxu0 0.0
    %90 = vmatpush2.msra.mxu0 0.0
    %91 = vmatprep.subr.mxu0 0.0
    %92 = vmatpush2.msra.mxu0 0.0
    %93 = vmatprep.subr.mxu0 0.0
    %94 = vmatpush2.msra.mxu0 0.0
    %95 = vmatprep.subr.mxu0 0.0
    %96 = vmatpush2.msra.mxu0 0.0
    %97 = vmatprep.subr.mxu0 0.0
    %98 = vmatpush2.msra.mxu0 0.0
    %99 = vmatprep.subr.mxu0 0.0
    %100 = vmatpush2.msra.mxu0 0.0
    %101 = vmatprep.subr.mxu0 0.0
    %102 = vmatpush2.msra.mxu0 0.0
    %103 = vmatprep.mubr.f32.mxu0 0.0
    %104 = vmatmul.mubr.f32.gmra.mxu0 %v15
    %v105 = vpop.f32.mrf.mxu0
    %v106 = vadd.f32 %v37, %v105
    %v107 = vpop.f32.mrf.mxu0
    %108 = vdwg.mxu0
    %vm109 = vcmask 39936
    %v110 = vsel %vm109, %v106, -inf
    %111 = vmax.xlane.f32.xlu0 %v110
    %v112 = vpop.xlane.xlu0 %111
    %v113 = vsub.f32 %v106, %v112
    %v114 = vmul.f32 %v113, 1.442695
    %v115 = vpow.pop %v114
    %v116 = vsel %vm109, %v115, 0.0
    %117 = vadd.xlane.f32.xlu0 %v116
    %v118 = vpop.xlane.xlu0 %117
    %v119 = vrcp.pop %v118
    %v120 = vmul.f32 %v115, %v119
    %121 = vst.msk [vmem:[#allocation2] sm:$0xff] %vm109, %v120
    // Predicated region
    $region14: #{sbp_head_forward.1} parent=1 // pred_check
      _
    $region15: #{sbp_head_forward.1} parent=1 // pred_check_branch
      %123 = sbr.rel (0) target = $region17
    $region16: #{sbp_head_forward.1} parent=1 // pred_region
      %s125 = ssub.s32 128, 128
      %126 = vsyncadd [#allocation3], %s125
      %s128 = sshll.u32 [#allocation2], 4
      %s129 = int_to_ptr.vmem [resolvable:$true] %s128
      %131 = dma.vmem_to_hbm [thread:$0]  %s129, 128, %s3, [#allocation3]
    $region17: #{sbp_head_forward.1} parent=1 // pred_fallthru
      _
    // Predicated region
    $region18: #{sbp_head_forward.1} parent=1 // pred_check
      _
    $region19: #{sbp_head_forward.1} parent=1 // pred_check_branch
      %133 = sbr.rel (0) target = $region21
    $region20: #{sbp_head_forward.1} parent=1 // pred_region
      %134 = dma.done [#allocation3], 128
    $region21: #{sbp_head_forward.1} parent=1 // pred_fallthru
      _
    %135 = vsyncpa [#allocation3], 1

</llo_original>
